<compile_context>
chip_gen: v5e
topology: v5e:2x2
jax: 0.10.0
libtpu: 0.0.40
codegen_flags: <defaults>
</compile_context>

<pallas_src>
import jax
import jax.numpy as jnp
from jax.experimental import pallas as pl
from jax.experimental.pallas import tpu as pltpu

_LANE = 128      # TPU lane width
_TS_CAP = 65536  # max spatial lanes per grid step (~20 MiB double-buffered, f32)


def _round_up(x, m):
    return ((x + m - 1) // m) * m


def _pointwise_conv_kernel(x_ref, w_ref, b_ref, o_ref):
    # x_ref: (1, C_in, TS)   w_ref: (C_out, C_in)
    # b_ref: (C_out, 1)      o_ref: (1, C_out, TS)
    acc = jnp.dot(w_ref[...], x_ref[0], preferred_element_type=jnp.float32)
    o_ref[0] = (acc + b_ref[...]).astype(o_ref.dtype)


def pointwise_conv_nchw(x3d, w, b, *, ts, out_dtype=None):
    """x3d: (N, C_in, HW); w: (C_out, C_in); b: (C_out,). Returns (N, C_out, HW).

    `ts` must either equal HW or be a multiple of 128 (ragged last block is
    handled by Pallas boundary clipping — no wrapper padding required).
    """
    N, c_in, hw = x3d.shape
    c_out = w.shape[0]
    if out_dtype is None:
        out_dtype = x3d.dtype
    b2d = b.reshape(c_out, 1).astype(jnp.float32)

    grid = (N, pl.cdiv(hw, ts))

    in_bytes = N * c_in * hw * x3d.dtype.itemsize
    out_bytes = N * c_out * hw * jnp.dtype(out_dtype).itemsize
    param_bytes = w.size * w.dtype.itemsize + c_out * 4
    cost = pl.CostEstimate(
        flops=2 * N * c_out * c_in * hw,
        transcendentals=0,
        bytes_accessed=in_bytes + out_bytes + param_bytes,
    )

    return pl.pallas_call(
        _pointwise_conv_kernel,
        out_shape=jax.ShapeDtypeStruct((N, c_out, hw), out_dtype),
        grid_spec=pltpu.PrefetchScalarGridSpec(
            num_scalar_prefetch=0,
            grid=grid,
            in_specs=[
                pl.BlockSpec((1, c_in, ts), lambda n, s: (n, 0, s)),
                pl.BlockSpec((c_out, c_in), lambda n, s: (0, 0)),  # resident weight
                pl.BlockSpec((c_out, 1), lambda n, s: (0, 0)),     # resident bias
            ],
            out_specs=pl.BlockSpec((1, c_out, ts), lambda n, s: (n, 0, s)),
        ),
        compiler_params=pltpu.CompilerParams(
            dimension_semantics=("parallel", "parallel"),
            # ~320*ts bytes double-buffered; 32 MiB covers TS_CAP=65536 on every
            # generation (v5e default is only 16 MiB; v7x physical is 64 MiB).
            vmem_limit_bytes=32 << 20,
        ),
        cost_estimate=cost,
    )(x3d, w, b2d)


def start_conv_forward(x_nchw, conv_weight, conv_bias, *, out_dtype=None):
    """Replicates start_conv.forward (1x1 Conv2d, NCHW).

    x_nchw:      (N, C_in, H, W)
    conv_weight: (C_out, C_in, 1, 1)   (PyTorch Conv2d weight layout)
    conv_bias:   (C_out,)
    returns      (N, C_out, H, W)
    """
    N, c_in, H, W = x_nchw.shape
    c_out = conv_weight.shape[0]
    HW = H * W

    # NCHW -> (N, C_in, HW): pure reshape, no transpose / pad / extra HBM pass.
    x3d = x_nchw.reshape(N, c_in, HW)
    w_mat = conv_weight[:, :, 0, 0]  # (C_out, C_in)

    # Spatial tile selection (no wrapper padding in any branch):
    if HW > _TS_CAP:
        ts = _TS_CAP                       # 128-multiple; ragged last block OK
    elif N == 1 and HW >= 2 * _LANE:
        ts = _round_up(pl.cdiv(HW, 2), _LANE)  # >=2 parallel steps for v7x's 2 TCs
    else:
        ts = HW                            # block == full dim: lane-128 rule satisfied

    y3d = pointwise_conv_nchw(x3d, w_mat, conv_bias, ts=ts, out_dtype=out_dtype)
    return y3d.reshape(N, c_out, H, W)


if __name__ == "__main__":
    # config: tcn_in_dim=4 (C_in), residual_channels=32 (C_out)
    N, C_IN, H, W = 2, 4, 16, 16
    C_OUT = 32

    key = jax.random.PRNGKey(0)
    kx, kw, kb = jax.random.split(key, 3)

    x = jax.random.normal(kx, (N, C_IN, H, W), dtype=jnp.float32)
    # Deterministic parameter init (Conv2d weight shape: (C_out, C_in, 1, 1))
    conv_weight = jax.random.normal(kw, (C_OUT, C_IN, 1, 1), dtype=jnp.float32) * 0.1
    conv_bias = jax.random.normal(kb, (C_OUT,), dtype=jnp.float32) * 0.1

    fwd = jax.jit(start_conv_forward)
    y = jax.block_until_ready(fwd(x, conv_weight, conv_bias))

    # reference check (pure JAX einsum)
    y_ref = jnp.einsum("nchw,oc->nohw", x, conv_weight[:, :, 0, 0]) + \
        conv_bias[None, :, None, None]
    assert y.shape == (N, C_OUT, H, W)
    assert jnp.allclose(y, y_ref, atol=1e-5, rtol=1e-5)

    # Secondary check: N == 1 with a non-128-multiple spatial extent exercises
    # the two-tile split (v7x dual-TC path) and the ragged last block
    # (clipped DMA in, dropped writes out) — i.e. the no-pad/no-slice path.
    x1 = jax.random.normal(jax.random.PRNGKey(1), (1, C_IN, 20, 20), dtype=jnp.float32)
    y1 = jax.block_until_ready(jax.jit(start_conv_forward)(x1, conv_weight, conv_bias))
    y1_ref = jnp.einsum("nchw,oc->nohw", x1, conv_weight[:, :, 0, 0]) + \
        conv_bias[None, :, None, None]
    assert jnp.allclose(y1, y1_ref, atol=1e-5, rtol=1e-5)

    print("KERNEL_OK")
</pallas_src>

<mosaic_0001>
module attributes {stable_mosaic.version = 11 : i64} {
  func.func @_pointwise_conv_kernel(%arg0: i32, %arg1: i32, %arg2: memref<1x4x256xf32, #tpu.memory_space<vmem>>, %arg3: memref<32x4xf32, #tpu.memory_space<vmem>>, %arg4: memref<32x1xf32, #tpu.memory_space<vmem>>, %arg5: memref<1x32x256xf32, #tpu.memory_space<vmem>>) attributes {dimension_semantics = [#tpu.dimension_semantics<parallel>, #tpu.dimension_semantics<parallel>], iteration_bounds = array<i64: 2, 1>, scalar_prefetch = 0 : i64, scratch_operands = 0 : i64, tpu.core_type = #tpu.core_type<tc>, window_params = [{transform_indices = @transform_0, window_bounds = array<i64: 1, 4, 256>}, {pipeline_mode = #tpu.pipeline_mode<synchronous>, transform_indices = @transform_1, window_bounds = array<i64: 32, 4>}, {pipeline_mode = #tpu.pipeline_mode<synchronous>, transform_indices = @transform_2, window_bounds = array<i64: 32, 1>}, {transform_indices = @transform_3, window_bounds = array<i64: 1, 32, 256>}]} {
    %c0 = arith.constant 0 : index
    %c0_0 = arith.constant 0 : index
    %0 = vector.load %arg3[%c0, %c0_0] : memref<32x4xf32, #tpu.memory_space<vmem>>, vector<32x4xf32>
    %c0_1 = arith.constant 0 : index
    %c0_2 = arith.constant 0 : index
    %c0_3 = arith.constant 0 : index
    %1 = vector.load %arg2[%c0_1, %c0_2, %c0_3] : memref<1x4x256xf32, #tpu.memory_space<vmem>>, vector<1x4x256xf32>
    %2 = vector.shape_cast %1 : vector<1x4x256xf32> to vector<4x256xf32>
    %cst = arith.constant dense<0.000000e+00> : vector<32x256xf32>
    %3 = tpu.matmul %0, %2, %cst {dimension_numbers = #tpu.dot_dimension_numbers<[1], [0], [0], [1], [0, 0, 1, 1], [], []>} : vector<32x4xf32>, vector<4x256xf32>, vector<32x256xf32> -> vector<32x256xf32>
    %c0_4 = arith.constant 0 : index
    %c0_5 = arith.constant 0 : index
    %4 = vector.load %arg4[%c0_4, %c0_5] : memref<32x1xf32, #tpu.memory_space<vmem>>, vector<32x1xf32>
    %5 = vector.broadcast %4 : vector<32x1xf32> to vector<32x256xf32>
    %6 = arith.addf %3, %5 : vector<32x256xf32>
    %c0_6 = arith.constant 0 : index
    %c0_7 = arith.constant 0 : index
    %c0_8 = arith.constant 0 : index
    %7 = vector.load %arg5[%c0_6, %c0_7, %c0_8] : memref<1x32x256xf32, #tpu.memory_space<vmem>>, vector<1x32x256xf32>
    %8 = vector.shape_cast %7 : vector<1x32x256xf32> to vector<32x256xf32>
    %9 = vector.shape_cast %6 : vector<32x256xf32> to vector<1x32x256xf32>
    tpu.vector_store %arg5[%c0_6, %c0_7, %c0_8], %9 {strides = array<i32>} : memref<1x32x256xf32, #tpu.memory_space<vmem>>, vector<1x32x256xf32>,
    return
  }
  func.func @transform_0(%arg0: i32, %arg1: i32) -> (i32, i32, i32) {
    %c0_i32 = arith.constant 0 : i32
    %c0_i32_0 = arith.constant 0 : i32
    return %arg0, %c0_i32, %arg1 : i32, i32, i32
  }
  func.func @transform_1(%arg0: i32, %arg1: i32) -> (i32, i32) {
    %c0_i32 = arith.constant 0 : i32
    %c0_i32_0 = arith.constant 0 : i32
    %c0_i32_1 = arith.constant 0 : i32
    return %c0_i32, %c0_i32_0 : i32, i32
  }
  func.func @transform_2(%arg0: i32, %arg1: i32) -> (i32, i32) {
    %c0_i32 = arith.constant 0 : i32
    %c0_i32_0 = arith.constant 0 : i32
    %c0_i32_1 = arith.constant 0 : i32
    return %c0_i32, %c0_i32_0 : i32, i32
  }
  func.func @transform_3(%arg0: i32, %arg1: i32) -> (i32, i32, i32) {
    %c0_i32 = arith.constant 0 : i32
    %c0_i32_0 = arith.constant 0 : i32
    return %arg0, %c0_i32, %arg1 : i32, i32, i32
  }
}

</mosaic_0001>

<llo_original>
// kernel: start_conv_forward.1
$region0: #{start_conv_forward.1}
  #allocation0 [shape = 'u32[]', space=smem, size = 0x4, offset = 0x4, fixed_abs, tag = 'smem constant byte address 0x4 - core index']
  #allocation1 [shape = 'u32[72,128]{1,0:T(1,128)}', space=vmem, size = 0x9000, scoped, tag = 'internal scratch']
  %s0 = inlined_call_operand.vmem [shape: f32[2,4,256], index: 0, kind: input, shape index: {}]
  %s1 = inlined_call_operand.vmem [shape: f32[32,4], index: 1, kind: input, shape index: {}]
  %s2 = inlined_call_operand.vmem [shape: f32[32,1], index: 2, kind: input, shape index: {}]
  %s3 = inlined_call_operand.vmem [shape: f32[2,32,256], index: 3, kind: output, shape index: {}]
  %s4 = sld [smem:[#allocation0]]
  $region45: #{start_conv_forward.1} parent=0
    _
  %s6 = ssub.s32 1, %s4
  %s7 = scalar_select 0, %s6, %s4
  loop: start=0, step=1, limit=4
  $region2: #{start_conv_forward.1} parent=0 // loop_pre_header
    _
  $region3: #{start_conv_forward.1} parent=0 // loop_header
    %s9 = sphi 0, %s13
    %p10 = scmp.ge.s32.totalorder %s9, 4
    %s16 = sphi 0, %s28
    %s17 = sphi 0, %s24
    %s18 = sphi 0, %s16
    %s19 = sphi 0, %s17
    %s20 = sphi 0, %s18
    %s21 = sphi 0, %s19
    %s33 = sphi 0, %s35
    %s36 = sphi 0, %s33
    %s37 = sphi 0, %s36
    %s53 = sphi 0, %s37
    %s57 = sphi 0, %s57
    %s59 = sphi 0, %s57
    %s60 = sphi 0, %s59
    %s74 = sphi 0, %s60
    %s78 = sphi 0, %s78
    %s80 = sphi 0, %s78
    %s81 = sphi 0, %s80
    %s95 = sphi 0, %s81
    %s103 = sphi 0, %s105
    %s106 = sphi 0, %s103
    %s107 = sphi 0, %s106
    %s123 = sphi 0, %s107
  $region4: #{start_conv_forward.1} parent=0 // loop_header_branch
    %12 = sbr.rel (%p10) target = $region8
  $region5: #{start_conv_forward.1} parent=0 // loop_body
    %s14 = ssub.s32 %s9, 1
    %s15 = ssub.s32 %s9, 2
    %s22 = sadd.s32 1, %s17
    %p23 = scmp.ge.s32.totalorder %s22, 1
    %s24 = scalar_select %p23, 0, %s22
    %s25 = sadd.s32 1, %s16
    %s26 = scalar_select %p23, %s25, %s16
    %p27 = scmp.ge.s32.totalorder %s26, 2
    %s28 = scalar_select %p27, 0, %s26
    %s29 = ssub.s32 %s16, %s28
    %s30 = ssub.s32 %s17, %s24
    %s31 = sor.u32 %s29, %s30
    %p32 = scmp.eq.s32.totalorder %s31, 0
    %s34 = sadd.s32 %s33, 1
    %s35 = scalar_select %p32, %s33, %s34
    %p38 = pneg %p32
    %p39 = scmp.eq.s32.totalorder %s9, 1
    %p40 = por %p38, %p39
    %p41 = scmp.ne.s32.totalorder %s33, %s36
    %p42 = scmp.eq.s32.totalorder %s9, 0
    %p43 = por %p41, %p42
    %p44 = scmp.ne.s32.totalorder %s33, %s36
    %p45 = scmp.eq.s32.totalorder %s14, 1
    %p46 = por %p44, %p45
    %p47 = scmp.ne.s32.totalorder %s36, %s37
    %p48 = scmp.eq.s32.totalorder %s14, 0
    %p49 = por %p47, %p48
    %p50 = scmp.ne.s32.totalorder %s36, %s37
    %p51 = scmp.eq.s32.totalorder %s15, 1
    %p52 = por %p50, %p51
    %p54 = scmp.ne.s32.totalorder %s37, %s53
    %p55 = scmp.eq.s32.totalorder %s15, 0
    %p56 = por %p54, %p55
    %s58 = sadd.s32 %s57, 1
    %p61 = scmp.eq.s32.totalorder %s9, 1
    %p62 = scmp.ne.s32.totalorder %s57, %s59
    %p63 = scmp.eq.s32.totalorder %s9, 0
    %p64 = por %p62, %p63
    %p65 = scmp.ne.s32.totalorder %s57, %s59
    %p66 = scmp.eq.s32.totalorder %s14, 1
    %p67 = por %p65, %p66
    %p68 = scmp.ne.s32.totalorder %s59, %s60
    %p69 = scmp.eq.s32.totalorder %s14, 0
    %p70 = por %p68, %p69
    %p71 = scmp.ne.s32.totalorder %s59, %s60
    %p72 = scmp.eq.s32.totalorder %s15, 1
    %p73 = por %p71, %p72
    %p75 = scmp.ne.s32.totalorder %s60, %s74
    %p76 = scmp.eq.s32.totalorder %s15, 0
    %p77 = por %p75, %p76
    %s79 = sadd.s32 %s78, 1
    %p82 = scmp.eq.s32.totalorder %s9, 1
    %p83 = scmp.ne.s32.totalorder %s78, %s80
    %p84 = scmp.eq.s32.totalorder %s9, 0
    %p85 = por %p83, %p84
    %p86 = scmp.ne.s32.totalorder %s78, %s80
    %p87 = scmp.eq.s32.totalorder %s14, 1
    %p88 = por %p86, %p87
    %p89 = scmp.ne.s32.totalorder %s80, %s81
    %p90 = scmp.eq.s32.totalorder %s14, 0
    %p91 = por %p89, %p90
    %p92 = scmp.ne.s32.totalorder %s80, %s81
    %p93 = scmp.eq.s32.totalorder %s15, 1
    %p94 = por %p92, %p93
    %p96 = scmp.ne.s32.totalorder %s81, %s95
    %p97 = scmp.eq.s32.totalorder %s15, 0
    %p98 = por %p96, %p97
    %s99 = ssub.s32 %s16, %s28
    %s100 = ssub.s32 %s17, %s24
    %s101 = sor.u32 %s99, %s100
    %p102 = scmp.eq.s32.totalorder %s101, 0
    %s104 = sadd.s32 %s103, 1
    %s105 = scalar_select %p102, %s103, %s104
    %p108 = pneg %p102
    %p109 = scmp.eq.s32.totalorder %s9, 1
    %p110 = por %p108, %p109
    %p111 = scmp.ne.s32.totalorder %s103, %s106
    %p112 = scmp.eq.s32.totalorder %s9, 0
    %p113 = por %p111, %p112
    %p114 = scmp.ne.s32.totalorder %s103, %s106
    %p115 = scmp.eq.s32.totalorder %s14, 1
    %p116 = por %p114, %p115
    %p117 = scmp.ne.s32.totalorder %s106, %s107
    %p118 = scmp.eq.s32.totalorder %s14, 0
    %p119 = por %p117, %p118
    %p120 = scmp.ne.s32.totalorder %s106, %s107
    %p121 = scmp.eq.s32.totalorder %s15, 1
    %p122 = por %p120, %p121
    %p124 = scmp.ne.s32.totalorder %s107, %s123
    %p125 = scmp.eq.s32.totalorder %s15, 0
    %p126 = por %p124, %p125
    %p127 = scmp.le.s32.totalorder 1, %s9
    %p128 = scmp.lt.s32.totalorder %s9, 3
    %p129 = pnand %p127, %p128
    %p130 = pneg %p129
    // Predicated region
    $region9: #{start_conv_forward.1} parent=5 // pred_check
      _
    $region10: #{start_conv_forward.1} parent=5 // pred_check_branch
      %132 = sbr.rel (%p129) target = $region12
    $region11: #{start_conv_forward.1} parent=5 // pred_region
      %s133 = ssub.s32 %s9, 1
      // Predicated region
      $region13: #{start_conv_forward.1} parent=11 // pred_check
        %p134 = pneg %p70
      $region14: #{start_conv_forward.1} parent=11 // pred_check_branch
        %136 = sbr.rel (%p134) target = $region16
      $region15: #{start_conv_forward.1} parent=11 // pred_region
        _
      $region16: #{start_conv_forward.1} parent=11 // pred_fallthru
        _
      // Predicated region
      $region17: #{start_conv_forward.1} parent=11 // pred_check
        %p137 = pneg %p91
      $region18: #{start_conv_forward.1} parent=11 // pred_check_branch
        %139 = sbr.rel (%p137) target = $region20
      $region19: #{start_conv_forward.1} parent=11 // pred_region
        _
      $region20: #{start_conv_forward.1} parent=11 // pred_fallthru
        _
    $region12: #{start_conv_forward.1} parent=5 // pred_fallthru
      _
    %p140 = scmp.lt.s32.totalorder %s9, 2
    // Predicated region
    $region21: #{start_conv_forward.1} parent=5 // pred_check
      %p141 = pneg %p140
    $region22: #{start_conv_forward.1} parent=5 // pred_check_branch
      %143 = sbr.rel (%p141) target = $region24
    $region23: #{start_conv_forward.1} parent=5 // pred_region
      // Predicated region
      $region25: #{start_conv_forward.1} parent=23 // pred_check
        %p144 = pneg %p43
      $region26: #{start_conv_forward.1} parent=23 // pred_check_branch
        %146 = sbr.rel (%p144) target = $region28
      $region27: #{start_conv_forward.1} parent=23 // pred_region
        %s147 = smul.u32 2, %s17
        %p148 = scmp.lt.s32.totalorder %s16, 1
        %s149 = scalar_select %p148, %s16, 1
        %p150 = scmp.lt.s32.totalorder %s147, 1
        %s151 = scalar_select %p150, %s147, 1
        %s152 = smul.addr %s149, 2
        %s153 = sadd.s32 %s151, %s152
        %s154 = smul.addr %s153, 4
        %s155 = scalar_lea.vmem %s0, %s154
        %s156 = smul.u32 2, %s17
      $region28: #{start_conv_forward.1} parent=23 // pred_fallthru
        _
    $region24: #{start_conv_forward.1} parent=5 // pred_fallthru
      _
    %p157 = scmp.le.s32.totalorder 1, %s9
    %p158 = scmp.lt.s32.totalorder %s9, 3
    %p159 = pnand %p157, %p158
    %p160 = pneg %p159
    // Predicated region
    $region29: #{start_conv_forward.1} parent=5 // pred_check
      _
    $region30: #{start_conv_forward.1} parent=5 // pred_check_branch
      %162 = sbr.rel (%p159) target = $region32
    $region31: #{start_conv_forward.1} parent=5 // pred_region
      %s163 = ssub.s32 %s9, 1
      %s164 = smul.u32 2, %s19
      %p165 = scmp.lt.s32.totalorder %s18, 1
      %s166 = scalar_select %p165, %s18, 1
      %p167 = scmp.lt.s32.totalorder %s164, 1
      %s168 = scalar_select %p167, %s164, 1
      %s169 = smul.addr %s166, 2
      %s170 = sadd.s32 %s168, %s169
      %s171 = smul.addr %s170, 4
      %s172 = scalar_lea.vmem %s0, %s171
      %p173 = pneg %p49
      %p174 = pneg %p46
      %p175 = pneg %p70
      %p176 = pneg %p67
      %p177 = pneg %p91
      %p178 = pneg %p88
      %p179 = pneg %p119
      %p180 = pneg %p116
      %s181 = smul.u32 2, %s19
      %p182 = scmp.lt.s32.totalorder %s18, 1
      %s183 = scalar_select %p182, %s18, 1
      %p184 = scmp.lt.s32.totalorder %s181, 1
      %s185 = scalar_select %p184, %s181, 1
      %s186 = smul.addr %s183, 8
      %s187 = sadd.s32 %s185, %s186
      %s188 = smul.addr %s187, 8
      %s189 = scalar_lea.vmem %s3, %s188
      %s190 = smul.u32 2, %s19
      %p191 = scmp.lt.s32.totalorder %s18, 1
      %s192 = scalar_select %p191, %s18, 1
      %p193 = scmp.lt.s32.totalorder %s190, 1
      %s194 = scalar_select %p193, %s190, 1
      %s195 = smul.addr %s192, 2
      %s196 = sadd.s32 %s194, %s195
      %s197 = smul.addr %s196, 4
      %s198 = scalar_lea.vmem %s0, %s197
      %s199 = smul.u32 2, %s19
      %s200 = smul.u32 2, %s19
      %p201 = scmp.lt.s32.totalorder %s18, 1
      %s202 = scalar_select %p201, %s18, 1
      %p203 = scmp.lt.s32.totalorder %s200, 1
      %s204 = scalar_select %p203, %s200, 1
      %s205 = smul.addr %s202, 8
      %s206 = sadd.s32 %s204, %s205
      %s207 = smul.addr %s206, 8
      %s208 = scalar_lea.vmem %s3, %s207
      %s209 = smul.u32 2, %s19
      %v210 = vld [vmem:[%s1] sm:$0xff]
      %v211 = vld [vmem:[%s1 + $0x8] sm:$0xff]
      %v212 = vld [vmem:[%s1 + $0x10] sm:$0xff]
      %v213 = vld [vmem:[%s1 + $0x18] sm:$0xff]
      %v214 = vld [vmem:[%s198] sm:$0xff]
      %v215 = vld [vmem:[%s2] sm:$0xff]
      %v216 = vld [vmem:[%s2 + $0x8] sm:$0xff]
      %v217 = vld [vmem:[%s2 + $0x10] sm:$0xff]
      %v218 = vld [vmem:[%s2 + $0x18] sm:$0xff]
      %220 = vset.pattern.permute.xlu0 0
      %221 = vperm.xlu0 %220, %v215
      %v222 = vpop.permute.xlu0 %221
      %225 = vset.pattern.permute.xlu0 0
      %226 = vperm.xlu0 %225, %v216
      %v227 = vpop.permute.xlu0 %226
      %230 = vset.pattern.permute.xlu0 0
      %231 = vperm.xlu0 %230, %v217
      %v232 = vpop.permute.xlu0 %231
      %235 = vset.pattern.permute.xlu0 0
      %236 = vperm.xlu0 %235, %v218
      %v237 = vpop.permute.xlu0 %236
      %240 = vst [vmem:[#allocation1] ss:$2 sm:$0xff] %v214
      %v241 = vld.sshfl [vmem:[#allocation1] sm:$0xff pattern:$0x75316420]
      %v242 = vld.sshfl [vmem:[#allocation1 + $0x8] sm:$0xff pattern:$0x75316420]
      %vm243 = vcmask 31744
      %v245 = vsel %vm243, %v210, 0
      %v248 = vsel %vm243, %v211, 0
      %v251 = vsel %vm243, %v212, 0
      %v254 = vsel %vm243, %v213, 0
      %vm256 = vcmask 1043456
      %v257 = vsel %vm256, %v241, 0
      %v259 = vsel %vm256, %v242, 0
      %261 = vmatpush.msra.mxu0 0.0
      %262 = vmatpush.msra.mxu0 0.0
      %263 = vmatpush.msra.mxu0 0.0
      %264 = vmatpush.msra.mxu0 0.0
      %265 = vmatpush.msra.mxu0 0.0
      %266 = vmatpush.msra.mxu0 0.0
      %267 = vmatpush.msra.mxu0 0.0
      %268 = vmatpush.msra.mxu0 0.0
      %269 = vmatpush.msra.mxu0 0.0
      %270 = vmatpush.msra.mxu0 0.0
      %271 = vmatpush.msra.mxu0 0.0
      %272 = vmatpush.msra.mxu0 0.0
      %273 = vmatpush.msra.mxu0 0.0
      %274 = vmatpush.msra.mxu0 0.0
      %275 = vmatpush.msra.mxu0 0.0
      %276 = vmatpush.msra.mxu0 %v257
      %277 = vmatmul.f32.gmra.mxu0 %v245
      %v278 = vpop.f32.mrf.mxu0
      %v279 = vadd.f32 %v222, %v278
      %280 = vmatmul.f32.gmra.mxu0 %v248
      %v281 = vpop.f32.mrf.mxu0
      %v282 = vadd.f32 %v227, %v281
      %283 = vmatmul.f32.gmra.mxu0 %v251
      %v284 = vpop.f32.mrf.mxu0
      %v285 = vadd.f32 %v232, %v284
      %286 = vmatmul.f32.gmra.mxu0 %v254
      %v287 = vpop.f32.mrf.mxu0
      %v288 = vadd.f32 %v237, %v287
      %289 = vdwg.mxu0
      %290 = vmatpush.msra.mxu0 0.0
      %291 = vmatpush.msra.mxu0 0.0
      %292 = vmatpush.msra.mxu0 0.0
      %293 = vmatpush.msra.mxu0 0.0
      %294 = vmatpush.msra.mxu0 0.0
      %295 = vmatpush.msra.mxu0 0.0
      %296 = vmatpush.msra.mxu0 0.0
      %297 = vmatpush.msra.mxu0 0.0
      %298 = vmatpush.msra.mxu0 0.0
      %299 = vmatpush.msra.mxu0 0.0
      %300 = vmatpush.msra.mxu0 0.0
      %301 = vmatpush.msra.mxu0 0.0
      %302 = vmatpush.msra.mxu0 0.0
      %303 = vmatpush.msra.mxu0 0.0
      %304 = vmatpush.msra.mxu0 0.0
      %305 = vmatpush.msra.mxu0 %v259
      %306 = vmatmul.f32.gmra.mxu0 %v245
      %v307 = vpop.f32.mrf.mxu0
      %v308 = vadd.f32 %v222, %v307
      %309 = vmatmul.f32.gmra.mxu0 %v248
      %v310 = vpop.f32.mrf.mxu0
      %v311 = vadd.f32 %v227, %v310
      %312 = vmatmul.f32.gmra.mxu0 %v251
      %v313 = vpop.f32.mrf.mxu0
      %v314 = vadd.f32 %v232, %v313
      %315 = vmatmul.f32.gmra.mxu0 %v254
      %v316 = vpop.f32.mrf.mxu0
      %v317 = vadd.f32 %v237, %v316
      %318 = vdwg.mxu0
      %319 = vst [vmem:[%s208] sm:$0xff] %v279
      %320 = vst [vmem:[%s208 + $0x8] sm:$0xff] %v308
      %321 = vst [vmem:[%s208 + $0x10] sm:$0xff] %v282
      %322 = vst [vmem:[%s208 + $0x18] sm:$0xff] %v311
      %323 = vst [vmem:[%s208 + $0x20] sm:$0xff] %v285
      %324 = vst [vmem:[%s208 + $0x28] sm:$0xff] %v314
      %325 = vst [vmem:[%s208 + $0x30] sm:$0xff] %v288
      %326 = vst [vmem:[%s208 + $0x38] sm:$0xff] %v317
      %s327 = smul.u32 2, %s19
      %p328 = scmp.lt.s32.totalorder %s18, 1
      %s329 = scalar_select %p328, %s18, 1
      %p330 = scmp.lt.s32.totalorder %s327, 1
      %s331 = scalar_select %p330, %s327, 1
      %s332 = smul.addr %s329, 8
      %s333 = sadd.s32 %s331, %s332
      %s334 = smul.addr %s333, 8
      %s335 = scalar_lea.vmem %s3, %s334
      // Predicated region
      $region33: #{start_conv_forward.1} parent=31 // pred_check
        %p336 = pneg %p116
      $region34: #{start_conv_forward.1} parent=31 // pred_check_branch
        %338 = sbr.rel (%p336) target = $region36
      $region35: #{start_conv_forward.1} parent=31 // pred_region
        %s339 = smul.u32 2, %s19
      $region36: #{start_conv_forward.1} parent=31 // pred_fallthru
        _
    $region32: #{start_conv_forward.1} parent=5 // pred_fallthru
      _
    %p340 = scmp.le.s32.totalorder 2, %s9
    // Predicated region
    $region37: #{start_conv_forward.1} parent=5 // pred_check
      %p341 = pneg %p340
    $region38: #{start_conv_forward.1} parent=5 // pred_check_branch
      %343 = sbr.rel (%p341) target = $region40
    $region39: #{start_conv_forward.1} parent=5 // pred_region
      %s344 = ssub.s32 %s9, 2
      // Predicated region
      $region41: #{start_conv_forward.1} parent=39 // pred_check
        %p345 = pneg %p122
      $region42: #{start_conv_forward.1} parent=39 // pred_check_branch
        %347 = sbr.rel (%p345) target = $region44
      $region43: #{start_conv_forward.1} parent=39 // pred_region
        %s348 = smul.u32 2, %s21
        %p349 = scmp.lt.s32.totalorder %s20, 1
        %s350 = scalar_select %p349, %s20, 1
        %p351 = scmp.lt.s32.totalorder %s348, 1
        %s352 = scalar_select %p351, %s348, 1
        %s353 = smul.addr %s350, 8
        %s354 = sadd.s32 %s352, %s353
        %s355 = smul.addr %s354, 8
        %s356 = scalar_lea.vmem %s3, %s355
      $region44: #{start_conv_forward.1} parent=39 // pred_fallthru
        _
    $region40: #{start_conv_forward.1} parent=5 // pred_fallthru
      _
  $region6: #{start_conv_forward.1} parent=0 // loop_footer
    %s13 = sadd.s32 1, %s9
  $region7: #{start_conv_forward.1} parent=0 // loop_footer_branch
    %8 = sbr.rel target = $region3
  $region8: #{start_conv_forward.1} parent=0 // loop_exit
    _

</llo_original>
